<compile_context>
chip_gen: v5e
topology: v5e:2x2
jax: 0.10.0
libtpu: 0.0.40
codegen_flags: <defaults>
</compile_context>

<pallas_src>
import functools

import jax
import jax.numpy as jnp
from jax.experimental import pallas as pl
from jax.experimental.pallas import tpu as pltpu


def _round_up(n, m):
    return ((n + m - 1) // m) * m


# ----------------------------- kernels -----------------------------------------


def _kernel_identity_skip(x_ref, w1_ref, b1_ref, w2_ref, o_ref, *, compute_dtype):
    x = x_ref[...]                                     # [TM, in] f32
    h = jnp.maximum(x, 0.0)                            # ReLU in f32
    # dropout: inference-mode identity
    # TODO(synk): training-mode dropout (random mask + 1/(1-p) scaling) not implemented.
    h = jnp.dot(h.astype(compute_dtype), w1_ref[...],
                preferred_element_type=jnp.float32) + b1_ref[...]
    y = jnp.dot(h.astype(compute_dtype), w2_ref[...],
                preferred_element_type=jnp.float32)
    o_ref[...] = (y + x).astype(o_ref.dtype)           # residual in f32 (exact)


def _kernel_downsample_skip(x_ref, w1_ref, b1_ref, w2_ref, s_ref, o_ref, *,
                            compute_dtype):
    x = x_ref[...]                                     # [TM, in] f32
    h = jnp.maximum(x, 0.0)
    h = jnp.dot(h.astype(compute_dtype), w1_ref[...],
                preferred_element_type=jnp.float32) + b1_ref[...]
    y = jnp.dot(h.astype(compute_dtype), w2_ref[...],
                preferred_element_type=jnp.float32)
    # Nearest-neighbor resample of the raw input done in-kernel: x @ S, where S is a
    # constant 0/1 selection matrix (one 1.0 per output column), kept in f32 so the
    # skip path stays on the f32 path (no HBM skip tensor, no bf16 rounding of skip).
    skip = jnp.dot(x, s_ref[...], preferred_element_type=jnp.float32)
    o_ref[...] = (y + skip).astype(o_ref.dtype)


# ----------------------------- parameter preparation (hoisted) -------------------


def prepare_resmlp_params(w1, b1, w2, *, compute_dtype=jnp.bfloat16, lane_multiple=128):
    """Build TPU-friendly parameter tensors ONCE (hoist out of the per-call wrapper).

    w1: [latent, in_dim], b1: [latent], w2: [out_dim, latent]  (PyTorch nn.Linear layout)
    lane_multiple: latent padded to this multiple (128 everywhere; use 256 for large
    latent dims on v6e/v7x whose MXUs are 256x256).
    """
    latent, in_dim = w1.shape
    out_dim = w2.shape[0]
    lat_p = _round_up(latent, lane_multiple)

    w1_t = jnp.zeros((in_dim, lat_p), compute_dtype).at[:, :latent].set(
        w1.T.astype(compute_dtype))
    w2_t = jnp.zeros((lat_p, out_dim), compute_dtype).at[:latent, :].set(
        w2.T.astype(compute_dtype))
    b1_row = jnp.zeros((1, lat_p), jnp.float32).at[0, :latent].set(
        b1.astype(jnp.float32))

    if in_dim == out_dim:
        sel = None
    else:
        # nearest-neighbor indices: src = floor(dst * in/out)  (matches F.interpolate)
        idx = jnp.floor(jnp.arange(out_dim) * (in_dim / out_dim)).astype(jnp.int32)
        sel = jnp.zeros((in_dim, out_dim), jnp.float32).at[
            idx, jnp.arange(out_dim)].set(1.0)

    return dict(w1_t=w1_t, b1=b1_row, w2_t=w2_t, sel=sel,
                in_dim=in_dim, latent=latent, out_dim=out_dim,
                compute_dtype=compute_dtype)


# ----------------------------- forward ------------------------------------------


def resmlp_basic_apply(x, params, *, block_b=256):
    """x: [B, in_dim] -> [B, out_dim] f32, using pre-prepared params."""
    B, in_dim = x.shape
    assert in_dim == params["in_dim"], "x feature dim does not match prepared params"
    out_dim = params["out_dim"]
    w1_t, b1, w2_t, sel = params["w1_t"], params["b1"], params["w2_t"], params["sel"]
    lat_p = w1_t.shape[1]
    compute_dtype = params["compute_dtype"]
    downsample = sel is not None

    x = x.astype(jnp.float32)

    # Batch tile: multiple of 8 sublanes, capped at block_b, chosen so the grid has
    # >= 2 steps whenever B > 8 (both v7x TensorCores get work; pipeline can overlap)
    # while avoiding pathological zero-row padding.  Ragged final tiles are handled by
    # Pallas boundary masking (junk OOB rows only affect their own discarded outputs).
    tm = min(block_b, max(8, _round_up(-(-B // 2), 8)))
    tm = min(tm, _round_up(B, 8))
    grid = (pl.cdiv(B, tm),)

    # VMEM limit derived from actual buffer needs (x2 for double buffering), clamped to
    # [32 MiB, 64 MiB] -> safe headroom on v5e/v6e/v7x alike.
    itemsize = jnp.dtype(compute_dtype).itemsize
    resident_bytes = (w1_t.size + w2_t.size) * itemsize + b1.size * 4
    if downsample:
        resident_bytes += sel.size * 4
    streamed_bytes = tm * (in_dim + out_dim) * 4
    scratch_bytes = tm * lat_p * 4                         # intermediate h
    need = 2 * (resident_bytes + streamed_bytes) + 2 * scratch_bytes
    vmem_limit = int(min(64 * 1024 * 1024, max(32 * 1024 * 1024, 2 * need)))

    flops = 2 * B * lat_p * (in_dim + out_dim)
    if downsample:
        flops += 2 * B * in_dim * out_dim
    cost = pl.CostEstimate(
        flops=int(flops), transcendentals=0,
        bytes_accessed=int(B * (in_dim + out_dim) * 4 + resident_bytes))

    in_specs = [
        pl.BlockSpec((tm, in_dim), lambda i: (i, 0)),        # x tile (streamed, no copy)
        pl.BlockSpec((in_dim, lat_p), lambda i: (0, 0)),     # W1^T (VMEM-resident)
        pl.BlockSpec((1, lat_p), lambda i: (0, 0)),          # b1   (VMEM-resident)
        pl.BlockSpec((lat_p, out_dim), lambda i: (0, 0)),    # W2^T (VMEM-resident)
    ]
    operands = [x, w1_t, b1, w2_t]
    if downsample:
        in_specs.append(pl.BlockSpec((in_dim, out_dim), lambda i: (0, 0)))  # selection
        operands.append(sel)
        kernel = functools.partial(_kernel_downsample_skip, compute_dtype=compute_dtype)
    else:
        kernel = functools.partial(_kernel_identity_skip, compute_dtype=compute_dtype)

    out = pl.pallas_call(
        kernel,
        out_shape=jax.ShapeDtypeStruct((B, out_dim), jnp.float32),
        grid=grid,
        in_specs=in_specs,
        out_specs=pl.BlockSpec((tm, out_dim), lambda i: (i, 0)),
        compiler_params=pltpu.CompilerParams(
            dimension_semantics=("parallel",),
            vmem_limit_bytes=vmem_limit,
        ),
        cost_estimate=cost,
    )(*operands)
    return out


def resmlp_basic(x, w1, b1, w2, *, compute_dtype=jnp.bfloat16, block_b=256):
    """One-shot convenience wrapper. For repeated calls, build the params once with
    prepare_resmlp_params() and use resmlp_basic_apply() so the weight transpose /
    pad / cast is not redone every forward."""
    params = prepare_resmlp_params(w1, b1, w2, compute_dtype=compute_dtype)
    return resmlp_basic_apply(x, params, block_b=block_b)


# ----------------------------- reference & test ----------------------------------


def make_params(key, in_dim, latent_dim, out_dim):
    k1, k2 = jax.random.split(key)
    bound = 1.0 / (in_dim ** 0.5)
    w1 = jax.random.uniform(k1, (latent_dim, in_dim), jnp.float32, -bound, bound)
    b1 = jax.random.uniform(k2, (latent_dim,), jnp.float32, -bound, bound)
    # nn.Linear(latent_dim, out_dim, bias=False), zero-initialized by the module
    w2 = jnp.zeros((out_dim, latent_dim), jnp.float32)
    return w1, b1, w2


def reference(x, w1, b1, w2):
    in_dim = x.shape[1]
    out_dim = w2.shape[0]
    h = jnp.maximum(x, 0.0)
    h = h @ w1.T + b1
    y = h @ w2.T
    if in_dim != out_dim:
        idx = jnp.floor(jnp.arange(out_dim) * (in_dim / out_dim)).astype(jnp.int32)
        skip = x[:, idx]
    else:
        skip = x
    return y + skip


if __name__ == "__main__":
    key = jax.random.PRNGKey(0)
    kx, kp1, kp2, kx2 = jax.random.split(key, 4)

    # --- Config A: in_dim == out_dim (identity skip), faithful zero-init projection ---
    B, in_dim, latent_dim, out_dim = 64, 48, 96, 48
    x = jax.random.normal(kx, (B, in_dim), jnp.float32)
    w1, b1, w2_zero = make_params(kp1, in_dim, latent_dim, out_dim)
    params_a = prepare_resmlp_params(w1, b1, w2_zero)            # hoisted: built once
    out_a = jax.block_until_ready(resmlp_basic_apply(x, params_a))
    exp_a = reference(x, w1, b1, w2_zero)
    assert out_a.shape == (B, out_dim)
    assert jnp.allclose(out_a, exp_a, atol=1e-6, rtol=1e-6), "mismatch (identity skip)"

    # --- Config B: in_dim != out_dim (nearest-neighbor skip), zero-init projection ---
    B, in_dim, latent_dim, out_dim = 64, 48, 96, 24
    xb = jax.random.normal(kx2, (B, in_dim), jnp.float32)
    w1b, b1b, w2b_zero = make_params(kp2, in_dim, latent_dim, out_dim)
    params_b = prepare_resmlp_params(w1b, b1b, w2b_zero)
    out_b = jax.block_until_ready(resmlp_basic_apply(xb, params_b))
    exp_b = reference(xb, w1b, b1b, w2b_zero)
    assert out_b.shape == (B, out_dim)
    # tolerance kept modest to be robust across MXU f32 pass configurations; the
    # selection matmul is value-preserving whenever the f32 matmul path is exact.
    assert jnp.allclose(out_b, exp_b, atol=2e-2, rtol=2e-2), "mismatch (downsample skip)"

    # --- Config B with random projection weights: full bf16 MXU path ---
    bound2 = 1.0 / (latent_dim ** 0.5)
    w2_rand = jax.random.uniform(jax.random.PRNGKey(1), (out_dim, latent_dim),
                                 jnp.float32, -bound2, bound2)
    params_r = prepare_resmlp_params(w1b, b1b, w2_rand)          # bf16 compute (default)
    out_r = jax.block_until_ready(resmlp_basic_apply(xb, params_r))
    exp_r = reference(xb, w1b, b1b, w2_rand)
    assert jnp.allclose(out_r, exp_r, atol=1e-1, rtol=5e-2), "mismatch (bf16 path)"

    # --- Explicit f32 compute option (nn.Linear-like numerics) ---
    params_f = prepare_resmlp_params(w1b, b1b, w2_rand, compute_dtype=jnp.float32)
    out_f = jax.block_until_ready(resmlp_basic_apply(xb, params_f))
    assert jnp.allclose(out_f, exp_r, atol=5e-2, rtol=5e-2), "mismatch (f32 path)"

    print("KERNEL_OK")
</pallas_src>

<mosaic_0001>
module attributes {stable_mosaic.version = 11 : i64} {
  func.func @_kernel_identity_skip(%arg0: i32, %arg1: memref<32x48xf32, #tpu.memory_space<vmem>>, %arg2: memref<48x128xbf16, #tpu.memory_space<vmem>>, %arg3: memref<1x128xf32, #tpu.memory_space<vmem>>, %arg4: memref<128x48xbf16, #tpu.memory_space<vmem>>, %arg5: memref<32x48xf32, #tpu.memory_space<vmem>>) attributes {dimension_semantics = [#tpu.dimension_semantics<parallel>], iteration_bounds = array<i64: 2>, scalar_prefetch = 0 : i64, scratch_operands = 0 : i64, tpu.core_type = #tpu.core_type<tc>, window_params = [{transform_indices = @transform_0, window_bounds = array<i64: 32, 48>}, {pipeline_mode = #tpu.pipeline_mode<synchronous>, transform_indices = @transform_1, window_bounds = array<i64: 48, 128>}, {pipeline_mode = #tpu.pipeline_mode<synchronous>, transform_indices = @transform_2, window_bounds = array<i64: 1, 128>}, {pipeline_mode = #tpu.pipeline_mode<synchronous>, transform_indices = @transform_3, window_bounds = array<i64: 128, 48>}, {transform_indices = @transform_4, window_bounds = array<i64: 32, 48>}]} {
    %c0 = arith.constant 0 : index
    %c0_0 = arith.constant 0 : index
    %0 = vector.load %arg1[%c0, %c0_0] : memref<32x48xf32, #tpu.memory_space<vmem>>, vector<32x48xf32>
    %cst = arith.constant 0.000000e+00 : f32
    %1 = vector.broadcast %cst : f32 to vector<32x48xf32>
    %2 = arith.maximumf %0, %1 : vector<32x48xf32>
    %3 = arith.truncf %2 : vector<32x48xf32> to vector<32x48xbf16>
    %c0_1 = arith.constant 0 : index
    %c0_2 = arith.constant 0 : index
    %4 = vector.load %arg2[%c0_1, %c0_2] : memref<48x128xbf16, #tpu.memory_space<vmem>>, vector<48x128xbf16>
    %cst_3 = arith.constant dense<0.000000e+00> : vector<32x128xf32>
    %5 = tpu.matmul %3, %4, %cst_3 {dimension_numbers = #tpu.dot_dimension_numbers<[1], [0], [0], [1], [0, 0, 1, 1], [], []>} : vector<32x48xbf16>, vector<48x128xbf16>, vector<32x128xf32> -> vector<32x128xf32>
    %c0_4 = arith.constant 0 : index
    %c0_5 = arith.constant 0 : index
    %6 = vector.load %arg3[%c0_4, %c0_5] : memref<1x128xf32, #tpu.memory_space<vmem>>, vector<1x128xf32>
    %7 = vector.broadcast %6 : vector<1x128xf32> to vector<32x128xf32>
    %8 = arith.addf %5, %7 : vector<32x128xf32>
    %9 = arith.truncf %8 : vector<32x128xf32> to vector<32x128xbf16>
    %c0_6 = arith.constant 0 : index
    %c0_7 = arith.constant 0 : index
    %10 = vector.load %arg4[%c0_6, %c0_7] : memref<128x48xbf16, #tpu.memory_space<vmem>>, vector<128x48xbf16>
    %cst_8 = arith.constant dense<0.000000e+00> : vector<32x48xf32>
    %11 = tpu.matmul %9, %10, %cst_8 {dimension_numbers = #tpu.dot_dimension_numbers<[1], [0], [0], [1], [0, 0, 1, 1], [], []>} : vector<32x128xbf16>, vector<128x48xbf16>, vector<32x48xf32> -> vector<32x48xf32>
    %12 = arith.addf %11, %0 : vector<32x48xf32>
    %c0_9 = arith.constant 0 : index
    %c0_10 = arith.constant 0 : index
    %13 = vector.load %arg5[%c0_9, %c0_10] : memref<32x48xf32, #tpu.memory_space<vmem>>, vector<32x48xf32>
    tpu.vector_store %arg5[%c0_9, %c0_10], %12 {strides = array<i32>} : memref<32x48xf32, #tpu.memory_space<vmem>>, vector<32x48xf32>,
    return
  }
  func.func @transform_0(%arg0: i32) -> (i32, i32) {
    %c0_i32 = arith.constant 0 : i32
    %c0_i32_0 = arith.constant 0 : i32
    return %arg0, %c0_i32 : i32, i32
  }
  func.func @transform_1(%arg0: i32) -> (i32, i32) {
    %c0_i32 = arith.constant 0 : i32
    %c0_i32_0 = arith.constant 0 : i32
    %c0_i32_1 = arith.constant 0 : i32
    return %c0_i32, %c0_i32_0 : i32, i32
  }
  func.func @transform_2(%arg0: i32) -> (i32, i32) {
    %c0_i32 = arith.constant 0 : i32
    %c0_i32_0 = arith.constant 0 : i32
    %c0_i32_1 = arith.constant 0 : i32
    return %c0_i32, %c0_i32_0 : i32, i32
  }
  func.func @transform_3(%arg0: i32) -> (i32, i32) {
    %c0_i32 = arith.constant 0 : i32
    %c0_i32_0 = arith.constant 0 : i32
    %c0_i32_1 = arith.constant 0 : i32
    return %c0_i32, %c0_i32_0 : i32, i32
  }
  func.func @transform_4(%arg0: i32) -> (i32, i32) {
    %c0_i32 = arith.constant 0 : i32
    %c0_i32_0 = arith.constant 0 : i32
    return %arg0, %c0_i32 : i32, i32
  }
}

</mosaic_0001>

<llo_original>
// kernel: tpu_custom_call.1
$region0: #{tpu_custom_call.1}
  #allocation0 [shape = 'u32[]', space=smem, size = 0x4, offset = 0x4, fixed_abs, tag = 'smem constant byte address 0x4 - core index']
  #allocation1 [shape = 'u32[72,128]{1,0:T(1,128)}', space=vmem, size = 0x9000, scoped, tag = 'internal scratch']
  %s0 = inlined_call_operand.vmem [shape: f32[64,48], index: 0, kind: input, shape index: {}]
  %s1 = inlined_call_operand.vmem [shape: bf16[48,128], index: 1, kind: input, shape index: {}]
  %s2 = inlined_call_operand.vmem [shape: f32[1,128], index: 2, kind: input, shape index: {}]
  %s3 = inlined_call_operand.vmem [shape: bf16[128,48], index: 3, kind: input, shape index: {}]
  %s4 = inlined_call_operand.vmem [shape: f32[64,48], index: 4, kind: output, shape index: {}]
  %s5 = sld [smem:[#allocation0]]
  $region49: #{tpu_custom_call.1} parent=0
    _
  %s7 = ssub.s32 1, %s5
  %s8 = scalar_select 0, %s7, %s5
  loop: start=0, step=1, limit=4
  $region2: #{tpu_custom_call.1} parent=0 // loop_pre_header
    _
  $region3: #{tpu_custom_call.1} parent=0 // loop_header
    %s10 = sphi 0, %s14
    %p11 = scmp.ge.s32.totalorder %s10, 4
    %s20 = sphi 0, %s22
    %s23 = sphi 0, %s20
    %s24 = sphi 0, %s23
    %s40 = sphi 0, %s24
    %s44 = sphi 0, %s44
    %s46 = sphi 0, %s44
    %s47 = sphi 0, %s46
    %s61 = sphi 0, %s47
    %s65 = sphi 0, %s65
    %s67 = sphi 0, %s65
    %s68 = sphi 0, %s67
    %s82 = sphi 0, %s68
    %s86 = sphi 0, %s86
    %s88 = sphi 0, %s86
    %s89 = sphi 0, %s88
    %s103 = sphi 0, %s89
    %s109 = sphi 0, %s111
    %s112 = sphi 0, %s109
    %s113 = sphi 0, %s112
    %s129 = sphi 0, %s113
  $region4: #{tpu_custom_call.1} parent=0 // loop_header_branch
    %13 = sbr.rel (%p11) target = $region8
  $region5: #{tpu_custom_call.1} parent=0 // loop_body
    %s15 = ssub.s32 %s10, 1
    %s16 = ssub.s32 %s10, 2
    %s17 = sadd.s32 %s10, 1
    %s18 = ssub.s32 %s10, %s17
    %p19 = scmp.eq.s32.totalorder %s18, 0
    %s21 = sadd.s32 %s20, 1
    %s22 = scalar_select %p19, %s20, %s21
    %p25 = pneg %p19
    %p26 = scmp.eq.s32.totalorder %s10, 1
    %p27 = por %p25, %p26
    %p28 = scmp.ne.s32.totalorder %s20, %s23
    %p29 = scmp.eq.s32.totalorder %s10, 0
    %p30 = por %p28, %p29
    %p31 = scmp.ne.s32.totalorder %s20, %s23
    %p32 = scmp.eq.s32.totalorder %s15, 1
    %p33 = por %p31, %p32
    %p34 = scmp.ne.s32.totalorder %s23, %s24
    %p35 = scmp.eq.s32.totalorder %s15, 0
    %p36 = por %p34, %p35
    %p37 = scmp.ne.s32.totalorder %s23, %s24
    %p38 = scmp.eq.s32.totalorder %s16, 1
    %p39 = por %p37, %p38
    %p41 = scmp.ne.s32.totalorder %s24, %s40
    %p42 = scmp.eq.s32.totalorder %s16, 0
    %p43 = por %p41, %p42
    %s45 = sadd.s32 %s44, 1
    %p48 = scmp.eq.s32.totalorder %s10, 1
    %p49 = scmp.ne.s32.totalorder %s44, %s46
    %p50 = scmp.eq.s32.totalorder %s10, 0
    %p51 = por %p49, %p50
    %p52 = scmp.ne.s32.totalorder %s44, %s46
    %p53 = scmp.eq.s32.totalorder %s15, 1
    %p54 = por %p52, %p53
    %p55 = scmp.ne.s32.totalorder %s46, %s47
    %p56 = scmp.eq.s32.totalorder %s15, 0
    %p57 = por %p55, %p56
    %p58 = scmp.ne.s32.totalorder %s46, %s47
    %p59 = scmp.eq.s32.totalorder %s16, 1
    %p60 = por %p58, %p59
    %p62 = scmp.ne.s32.totalorder %s47, %s61
    %p63 = scmp.eq.s32.totalorder %s16, 0
    %p64 = por %p62, %p63
    %s66 = sadd.s32 %s65, 1
    %p69 = scmp.eq.s32.totalorder %s10, 1
    %p70 = scmp.ne.s32.totalorder %s65, %s67
    %p71 = scmp.eq.s32.totalorder %s10, 0
    %p72 = por %p70, %p71
    %p73 = scmp.ne.s32.totalorder %s65, %s67
    %p74 = scmp.eq.s32.totalorder %s15, 1
    %p75 = por %p73, %p74
    %p76 = scmp.ne.s32.totalorder %s67, %s68
    %p77 = scmp.eq.s32.totalorder %s15, 0
    %p78 = por %p76, %p77
    %p79 = scmp.ne.s32.totalorder %s67, %s68
    %p80 = scmp.eq.s32.totalorder %s16, 1
    %p81 = por %p79, %p80
    %p83 = scmp.ne.s32.totalorder %s68, %s82
    %p84 = scmp.eq.s32.totalorder %s16, 0
    %p85 = por %p83, %p84
    %s87 = sadd.s32 %s86, 1
    %p90 = scmp.eq.s32.totalorder %s10, 1
    %p91 = scmp.ne.s32.totalorder %s86, %s88
    %p92 = scmp.eq.s32.totalorder %s10, 0
    %p93 = por %p91, %p92
    %p94 = scmp.ne.s32.totalorder %s86, %s88
    %p95 = scmp.eq.s32.totalorder %s15, 1
    %p96 = por %p94, %p95
    %p97 = scmp.ne.s32.totalorder %s88, %s89
    %p98 = scmp.eq.s32.totalorder %s15, 0
    %p99 = por %p97, %p98
    %p100 = scmp.ne.s32.totalorder %s88, %s89
    %p101 = scmp.eq.s32.totalorder %s16, 1
    %p102 = por %p100, %p101
    %p104 = scmp.ne.s32.totalorder %s89, %s103
    %p105 = scmp.eq.s32.totalorder %s16, 0
    %p106 = por %p104, %p105
    %s107 = ssub.s32 %s10, %s17
    %p108 = scmp.eq.s32.totalorder %s107, 0
    %s110 = sadd.s32 %s109, 1
    %s111 = scalar_select %p108, %s109, %s110
    %p114 = pneg %p108
    %p115 = scmp.eq.s32.totalorder %s10, 1
    %p116 = por %p114, %p115
    %p117 = scmp.ne.s32.totalorder %s109, %s112
    %p118 = scmp.eq.s32.totalorder %s10, 0
    %p119 = por %p117, %p118
    %p120 = scmp.ne.s32.totalorder %s109, %s112
    %p121 = scmp.eq.s32.totalorder %s15, 1
    %p122 = por %p120, %p121
    %p123 = scmp.ne.s32.totalorder %s112, %s113
    %p124 = scmp.eq.s32.totalorder %s15, 0
    %p125 = por %p123, %p124
    %p126 = scmp.ne.s32.totalorder %s112, %s113
    %p127 = scmp.eq.s32.totalorder %s16, 1
    %p128 = por %p126, %p127
    %p130 = scmp.ne.s32.totalorder %s113, %s129
    %p131 = scmp.eq.s32.totalorder %s16, 0
    %p132 = por %p130, %p131
    %p133 = scmp.le.s32.totalorder 1, %s10
    %p134 = scmp.lt.s32.totalorder %s10, 3
    %p135 = pnand %p133, %p134
    %p136 = pneg %p135
    // Predicated region
    $region9: #{tpu_custom_call.1} parent=5 // pred_check
      _
    $region10: #{tpu_custom_call.1} parent=5 // pred_check_branch
      %138 = sbr.rel (%p135) target = $region12
    $region11: #{tpu_custom_call.1} parent=5 // pred_region
      %s139 = ssub.s32 %s10, 1
      // Predicated region
      $region13: #{tpu_custom_call.1} parent=11 // pred_check
        %p140 = pneg %p57
      $region14: #{tpu_custom_call.1} parent=11 // pred_check_branch
        %142 = sbr.rel (%p140) target = $region16
      $region15: #{tpu_custom_call.1} parent=11 // pred_region
        _
      $region16: #{tpu_custom_call.1} parent=11 // pred_fallthru
        _
      // Predicated region
      $region17: #{tpu_custom_call.1} parent=11 // pred_check
        %p143 = pneg %p78
      $region18: #{tpu_custom_call.1} parent=11 // pred_check_branch
        %145 = sbr.rel (%p143) target = $region20
      $region19: #{tpu_custom_call.1} parent=11 // pred_region
        _
      $region20: #{tpu_custom_call.1} parent=11 // pred_fallthru
        _
      // Predicated region
      $region21: #{tpu_custom_call.1} parent=11 // pred_check
        %p146 = pneg %p99
      $region22: #{tpu_custom_call.1} parent=11 // pred_check_branch
        %148 = sbr.rel (%p146) target = $region24
      $region23: #{tpu_custom_call.1} parent=11 // pred_region
        _
      $region24: #{tpu_custom_call.1} parent=11 // pred_fallthru
        _
    $region12: #{tpu_custom_call.1} parent=5 // pred_fallthru
      _
    %p149 = scmp.lt.s32.totalorder %s10, 2
    // Predicated region
    $region25: #{tpu_custom_call.1} parent=5 // pred_check
      %p150 = pneg %p149
    $region26: #{tpu_custom_call.1} parent=5 // pred_check_branch
      %152 = sbr.rel (%p150) target = $region28
    $region27: #{tpu_custom_call.1} parent=5 // pred_region
      // Predicated region
      $region29: #{tpu_custom_call.1} parent=27 // pred_check
        %p153 = pneg %p30
      $region30: #{tpu_custom_call.1} parent=27 // pred_check_branch
        %155 = sbr.rel (%p153) target = $region32
      $region31: #{tpu_custom_call.1} parent=27 // pred_region
        %s156 = smul.u32 4, %s10
        %p157 = scmp.lt.s32.totalorder %s156, 7
        %s158 = scalar_select %p157, %s156, 7
        %s159 = smul.addr %s158, 8
        %s160 = scalar_lea.vmem %s0, %s159
        %s161 = smul.u32 4, %s10
      $region32: #{tpu_custom_call.1} parent=27 // pred_fallthru
        _
    $region28: #{tpu_custom_call.1} parent=5 // pred_fallthru
      _
    %p162 = scmp.le.s32.totalorder 1, %s10
    %p163 = scmp.lt.s32.totalorder %s10, 3
    %p164 = pnand %p162, %p163
    %p165 = pneg %p164
    // Predicated region
    $region33: #{tpu_custom_call.1} parent=5 // pred_check
      _
    $region34: #{tpu_custom_call.1} parent=5 // pred_check_branch
      %167 = sbr.rel (%p164) target = $region36
    $region35: #{tpu_custom_call.1} parent=5 // pred_region
      %s168 = ssub.s32 %s10, 1
      %s169 = smul.u32 4, %s15
      %p170 = scmp.lt.s32.totalorder %s169, 7
      %s171 = scalar_select %p170, %s169, 7
      %s172 = smul.addr %s171, 8
      %s173 = scalar_lea.vmem %s0, %s172
      %p174 = pneg %p36
      %p175 = pneg %p33
      %p176 = pneg %p57
      %p177 = pneg %p54
      %p178 = pneg %p78
      %p179 = pneg %p75
      %p180 = pneg %p99
      %p181 = pneg %p96
      %p182 = pneg %p125
      %p183 = pneg %p122
      %s184 = smul.u32 4, %s15
      %p185 = scmp.lt.s32.totalorder %s184, 7
      %s186 = scalar_select %p185, %s184, 7
      %s187 = smul.addr %s186, 8
      %s188 = scalar_lea.vmem %s4, %s187
      %s189 = smul.u32 4, %s15
      %p190 = scmp.lt.s32.totalorder %s189, 7
      %s191 = scalar_select %p190, %s189, 7
      %s192 = smul.addr %s191, 8
      %s193 = scalar_lea.vmem %s0, %s192
      %s194 = smul.u32 4, %s15
      %s195 = smul.u32 4, %s15
      %p196 = scmp.lt.s32.totalorder %s195, 7
      %s197 = scalar_select %p196, %s195, 7
      %s198 = smul.addr %s197, 8
      %s199 = scalar_lea.vmem %s4, %s198
      %s200 = smul.u32 4, %s15
      %v202 = vld [vmem:[%s193] sm:$0xff]
      %v203 = vld [vmem:[%s193 + $0x8] sm:$0xff]
      %v204 = vld [vmem:[%s193 + $0x10] sm:$0xff]
      %v205 = vld [vmem:[%s193 + $0x18] sm:$0xff]
      %v206 = vmax.f32 %v202, 0.0
      %v207 = vmax.f32 %v203, 0.0
      %v208 = vmax.f32 %v204, 0.0
      %v209 = vmax.f32 %v205, 0.0
      %v210 = vpack.c.bf16 %v207, %v206
      %v211 = vpack.c.bf16 %v209, %v208
      %v212 = vld [vmem:[%s1] sm:$0xf]
      %v213 = vld [vmem:[%s1 + $0x4] sm:$0xf]
      %v214 = vld [vmem:[%s1 + $0x8] sm:$0xf]
      %v215 = vld [vmem:[%s1 + $0xc] sm:$0xf]
      %v216 = vld [vmem:[%s1 + $0x10] sm:$0xf]
      %v217 = vld [vmem:[%s1 + $0x14] sm:$0xf]
      %v218 = vld [vmem:[%s2] sm:$0x1]
      %v220 = vperm.slane %v218, 0
      %v228 = vunpack.c.l.b16 %v212
      %v229 = vunpack.c.l.b16 %v213
      %v230 = vunpack.c.l.b16 %v214
      %v231 = vunpack.c.l.b16 %v215
      %v232 = vunpack.c.l.b16 %v216
      %v233 = vunpack.c.l.b16 %v217
      %v234 = vpack.c.b16 %v229, %v228
      %v235 = vpack.c.b16 %v231, %v230
      %v236 = vpack.c.b16 %v233, %v232
      %vm240 = vcmask 392192
      %v242 = vsel %vm240, %v210, 0
      %v245 = vsel %vm240, %v211, 0
      %247 = vmatpush.bf16.msra.mxu0 0
      %248 = vmatpush.bf16.msra.mxu0 0
      %249 = vmatpush.bf16.msra.mxu0 0
      %250 = vmatpush.bf16.msra.mxu0 0
      %251 = vmatpush.bf16.msra.mxu0 0
      %252 = vmatpush.bf16.msra.mxu0 %v236
      %253 = vmatpush.bf16.msra.mxu0 %v235
      %254 = vmatpush.bf16.msra.mxu0 %v234
      %255 = vmatmul.bf16.gmra.mxu0 %v242
      %v256 = vpop.f32.mrf.mxu0
      %v257 = vadd.f32 %v220, %v256
      %v258 = vpop.f32.mrf.mxu0
      %v259 = vadd.f32 %v220, %v258
      %260 = vmatmul.bf16.gmra.mxu0 %v245
      %v261 = vpop.f32.mrf.mxu0
      %v262 = vadd.f32 %v220, %v261
      %v263 = vpop.f32.mrf.mxu0
      %v264 = vadd.f32 %v220, %v263
      %265 = vdwg.mxu0
      %v266 = vpack.c.bf16 %v259, %v257
      %v267 = vpack.c.bf16 %v264, %v262
      %v268 = vld [vmem:[%s3] sm:$0xf]
      %v269 = vld [vmem:[%s3 + $0x4] sm:$0xf]
      %v270 = vld [vmem:[%s3 + $0x8] sm:$0xf]
      %v271 = vld [vmem:[%s3 + $0xc] sm:$0xf]
      %v272 = vld [vmem:[%s3 + $0x10] sm:$0xf]
      %v273 = vld [vmem:[%s3 + $0x14] sm:$0xf]
      %v274 = vld [vmem:[%s3 + $0x18] sm:$0xf]
      %v275 = vld [vmem:[%s3 + $0x1c] sm:$0xf]
      %v276 = vld [vmem:[%s3 + $0x20] sm:$0xf]
      %v277 = vld [vmem:[%s3 + $0x24] sm:$0xf]
      %v278 = vld [vmem:[%s3 + $0x28] sm:$0xf]
      %v279 = vld [vmem:[%s3 + $0x2c] sm:$0xf]
      %v280 = vld [vmem:[%s3 + $0x30] sm:$0xf]
      %v281 = vld [vmem:[%s3 + $0x34] sm:$0xf]
      %v282 = vld [vmem:[%s3 + $0x38] sm:$0xf]
      %v283 = vld [vmem:[%s3 + $0x3c] sm:$0xf]
      %v300 = vunpack.c.l.b16 %v268
      %v301 = vunpack.c.l.b16 %v269
      %v302 = vunpack.c.l.b16 %v270
      %v303 = vunpack.c.l.b16 %v271
      %v304 = vunpack.c.l.b16 %v272
      %v305 = vunpack.c.l.b16 %v273
      %v306 = vunpack.c.l.b16 %v274
      %v307 = vunpack.c.l.b16 %v275
      %v308 = vunpack.c.l.b16 %v276
      %v309 = vunpack.c.l.b16 %v277
      %v310 = vunpack.c.l.b16 %v278
      %v311 = vunpack.c.l.b16 %v279
      %v312 = vunpack.c.l.b16 %v280
      %v313 = vunpack.c.l.b16 %v281
      %v314 = vunpack.c.l.b16 %v282
      %v315 = vunpack.c.l.b16 %v283
      %v316 = vpack.c.b16 %v301, %v300
      %v317 = vpack.c.b16 %v303, %v302
      %v318 = vpack.c.b16 %v305, %v304
      %v319 = vpack.c.b16 %v307, %v306
      %v320 = vpack.c.b16 %v309, %v308
      %v321 = vpack.c.b16 %v311, %v310
      %v322 = vpack.c.b16 %v313, %v312
      %v323 = vpack.c.b16 %v315, %v314
      %332 = vmatpush.bf16.msra.mxu0 %v323
      %333 = vmatpush.bf16.msra.mxu0 %v322
      %334 = vmatpush.bf16.msra.mxu0 %v321
      %335 = vmatpush.bf16.msra.mxu0 %v320
      %336 = vmatpush.bf16.msra.mxu0 %v319
      %337 = vmatpush.bf16.msra.mxu0 %v318
      %338 = vmatpush.bf16.msra.mxu0 %v317
      %339 = vmatpush.bf16.msra.mxu0 %v316
      %340 = vmatmul.bf16.gmra.mxu0 %v266
      %v341 = vpop.f32.mrf.mxu0
      %v342 = vadd.f32 %v202, %v341
      %v343 = vpop.f32.mrf.mxu0
      %v344 = vadd.f32 %v203, %v343
      %345 = vmatmul.bf16.gmra.mxu0 %v267
      %v346 = vpop.f32.mrf.mxu0
      %v347 = vadd.f32 %v204, %v346
      %v348 = vpop.f32.mrf.mxu0
      %v349 = vadd.f32 %v205, %v348
      %350 = vdwg.mxu0
      %351 = vst.msk [vmem:[%s199] sm:$0xff] %vm240, %v342
      %352 = vst.msk [vmem:[%s199 + $0x8] sm:$0xff] %vm240, %v344
      %353 = vst.msk [vmem:[%s199 + $0x10] sm:$0xff] %vm240, %v347
      %354 = vst.msk [vmem:[%s199 + $0x18] sm:$0xff] %vm240, %v349
      %s355 = smul.u32 4, %s15
      %p356 = scmp.lt.s32.totalorder %s355, 7
      %s357 = scalar_select %p356, %s355, 7
      %s358 = smul.addr %s357, 8
      %s359 = scalar_lea.vmem %s4, %s358
      // Predicated region
      $region37: #{tpu_custom_call.1} parent=35 // pred_check
        %p360 = pneg %p122
      $region38: #{tpu_custom_call.1} parent=35 // pred_check_branch
        %362 = sbr.rel (%p360) target = $region40
      $region39: #{tpu_custom_call.1} parent=35 // pred_region
        %s363 = smul.u32 4, %s15
      $region40: #{tpu_custom_call.1} parent=35 // pred_fallthru
        _
    $region36: #{tpu_custom_call.1} parent=5 // pred_fallthru
      _
    %p364 = scmp.le.s32.totalorder 2, %s10
    // Predicated region
    $region41: #{tpu_custom_call.1} parent=5 // pred_check
      %p365 = pneg %p364
    $region42: #{tpu_custom_call.1} parent=5 // pred_check_branch
      %367 = sbr.rel (%p365) target = $region44
    $region43: #{tpu_custom_call.1} parent=5 // pred_region
      %s368 = ssub.s32 %s10, 2
      // Predicated region
      $region45: #{tpu_custom_call.1} parent=43 // pred_check
        %p369 = pneg %p128
      $region46: #{tpu_custom_call.1} parent=43 // pred_check_branch
        %371 = sbr.rel (%p369) target = $region48
      $region47: #{tpu_custom_call.1} parent=43 // pred_region
        %s372 = smul.u32 4, %s16
        %p373 = scmp.lt.s32.totalorder %s372, 7
        %s374 = scalar_select %p373, %s372, 7
        %s375 = smul.addr %s374, 8
        %s376 = scalar_lea.vmem %s4, %s375
      $region48: #{tpu_custom_call.1} parent=43 // pred_fallthru
        _
    $region44: #{tpu_custom_call.1} parent=5 // pred_fallthru
      _
  $region6: #{tpu_custom_call.1} parent=0 // loop_footer
    %s14 = sadd.s32 1, %s10
  $region7: #{tpu_custom_call.1} parent=0 // loop_footer_branch
    %9 = sbr.rel target = $region3
  $region8: #{tpu_custom_call.1} parent=0 // loop_exit
    _

</llo_original>
